<compile_context>
chip_gen: v5e
topology: v5e:2x2
jax: 0.10.0
libtpu: 0.0.40
codegen_flags: <defaults>
</compile_context>

<pallas_src>
import jax
import jax.numpy as jnp
from jax.experimental import pallas as pl
from jax.experimental.pallas import tpu as pltpu

LANE = 128


def _round_up(x, m):
    return (x + m - 1) // m * m


def mlp_kernel(fp_ref, pdi_ref, w1f_ref, w1p_ref, b1_ref,
               w2_ref, b2_ref, w3_ref, b3_ref, o_ref):
    fp = fp_ref[...]                                                   # (TB, n_fp) f32
    pdi = pdi_ref[...]                                                 # (TB, 1)    f32

    # Layer 1: fused concat -> the PDI column is a rank-1 broadcast update.
    h1 = jnp.dot(fp.astype(jnp.bfloat16), w1f_ref[...],
                 preferred_element_type=jnp.float32)                   # (TB, L1) f32
    h1 = h1 + pdi * w1p_ref[...] + b1_ref[...]
    h1 = jnp.maximum(h1, 0.0)                       # ReLU (dropout = eval identity)

    # Layer 2
    h2 = jnp.dot(h1.astype(jnp.bfloat16), w2_ref[...],
                 preferred_element_type=jnp.float32)                   # (TB, L2) f32
    h2 = jnp.maximum(h2 + b2_ref[...], 0.0)

    # Output layer (lane-padded to 128; real outputs are cols [:11]).
    out = jnp.dot(h2.astype(jnp.bfloat16), w3_ref[...],
                  preferred_element_type=jnp.float32)                  # (TB, 128) f32
    o_ref[...] = (out + b3_ref[...]).astype(o_ref.dtype)               # bf16 store


def init_params(key, n_fp, l1=120, l2=120, n_out=11):
    """PyTorch-Linear-style uniform init. Weights stored transposed (in, out)."""
    ks = jax.random.split(key, 6)

    def lin(kw, kb, fan_in, fan_out):
        bound = 1.0 / jnp.sqrt(jnp.float32(fan_in))
        w = jax.random.uniform(kw, (fan_in, fan_out), jnp.float32, -bound, bound)
        b = jax.random.uniform(kb, (1, fan_out), jnp.float32, -bound, bound)
        return w, b

    w1, b1 = lin(ks[0], ks[1], n_fp + 1, l1)
    w2, b2 = lin(ks[2], ks[3], l1, l2)
    w3, b3 = lin(ks[4], ks[5], l2, n_out)
    return (w1, b1, w2, b2, w3, b3)


def prepare_params(params, n_fp):
    """Zero-pad all feature dims to the 128-lane width, split off the PDI row
    of layer-1, and pre-cast the matmul weights to bf16 (biases / PDI row stay
    f32 for the VPU path)."""
    w1, b1, w2, b2, w3, b3 = params
    l1, l2, n_out = w1.shape[1], w2.shape[1], w3.shape[1]
    L1, L2, NO = _round_up(l1, LANE), _round_up(l2, LANE), _round_up(n_out, LANE)

    w1f = (jnp.zeros((n_fp, L1), jnp.float32).at[:, :l1].set(w1[:n_fp])
           .astype(jnp.bfloat16))
    w1p = jnp.zeros((1, L1), jnp.float32).at[:, :l1].set(w1[n_fp:])
    b1p = jnp.zeros((1, L1), jnp.float32).at[:, :l1].set(b1)
    w2p = (jnp.zeros((L1, L2), jnp.float32).at[:l1, :l2].set(w2)
           .astype(jnp.bfloat16))
    b2p = jnp.zeros((1, L2), jnp.float32).at[:, :l2].set(b2)
    w3p = (jnp.zeros((L2, NO), jnp.float32).at[:l2, :n_out].set(w3)
           .astype(jnp.bfloat16))
    b3p = jnp.zeros((1, NO), jnp.float32).at[:, :n_out].set(b3)
    return (w1f, w1p, b1p, w2p, b2p, w3p, b3p), n_out


def _pick_tile(B, max_tb=2048, split_threshold=256):
    """Batch tile: big tiles to amortize per-step overhead, but >=2 grid steps
    for non-trivial batches so v7x megacore sharding gets both TensorCores."""
    if B <= split_threshold:
        return _round_up(B, 8)
    steps = max(2, pl.cdiv(B, max_tb))
    return _round_up(pl.cdiv(B, steps), 8)


def mlp_forward(fp, pdi, kparams, n_out=11):
    """fp: (B, n_fp) f32, pdi: (B, 1) f32.  Returns (B, n_out) f32."""
    fp = fp.astype(jnp.float32)
    pdi = pdi.astype(jnp.float32)
    w1f, w1p, b1p, w2p, b2p, w3p, b3p = kparams

    B, n_fp = fp.shape
    L1, L2, NO = w1f.shape[1], w2p.shape[1], w3p.shape[1]

    TB = _pick_tile(B)
    B_pad = _round_up(B, TB)
    if B_pad != B:
        fp = jnp.pad(fp, ((0, B_pad - B), (0, 0)))
        pdi = jnp.pad(pdi, ((0, B_pad - B), (0, 0)))
    grid = (B_pad // TB,)

    def row_spec(cols):
        return pl.BlockSpec((TB, cols), lambda i: (i, 0))

    def full(a):
        return pl.BlockSpec(a.shape, lambda i: (0, 0))   # VMEM-resident weights

    flops = 2 * B_pad * (n_fp * L1 + L1 + L1 * L2 + L2 * NO)
    bytes_accessed = (4 * (fp.size + pdi.size + w1p.size + b1p.size
                           + b2p.size + b3p.size)
                      + 2 * (w1f.size + w2p.size + w3p.size)
                      + 2 * B_pad * NO)                   # bf16 output writeback

    out = pl.pallas_call(
        mlp_kernel,
        out_shape=jax.ShapeDtypeStruct((B_pad, NO), jnp.bfloat16),
        grid=grid,
        in_specs=[row_spec(n_fp), row_spec(1),
                  full(w1f), full(w1p), full(b1p),
                  full(w2p), full(b2p), full(w3p), full(b3p)],
        out_specs=row_spec(NO),
        compiler_params=pltpu.CompilerParams(
            dimension_semantics=("parallel",),
            vmem_limit_bytes=48 * 1024 * 1024),
        cost_estimate=pl.CostEstimate(flops=flops, transcendentals=0,
                                      bytes_accessed=bytes_accessed),
    )(fp, pdi, w1f, w1p, b1p, w2p, b2p, w3p, b3p)

    return out[:B, :n_out].astype(jnp.float32)


def _reference(fp, pdi, params):
    x = jnp.concatenate([fp, pdi], axis=1)
    w1, b1, w2, b2, w3, b3 = params
    h = jnp.maximum(x @ w1 + b1, 0.0)
    h = jnp.maximum(h @ w2 + b2, 0.0)
    return h @ w3 + b3


if __name__ == "__main__":
    key = jax.random.PRNGKey(0)
    n_fp = 32

    k_fp, k_pdi, k_params, k_fp2, k_pdi2 = jax.random.split(key, 5)
    params = init_params(k_params, n_fp)
    kparams, n_out = prepare_params(params, n_fp)

    # bf16 MXU operands / bf16 output => relaxed tolerance vs the f32 reference.
    TOL = dict(atol=5e-2, rtol=5e-2)

    # Small-batch case (single grid step).
    batch = 8
    fp = jax.random.normal(k_fp, (batch, n_fp), jnp.float32)
    pdi = jax.random.normal(k_pdi, (batch, 1), jnp.float32)
    out = mlp_forward(fp, pdi, kparams, n_out)
    jax.block_until_ready(out)
    ref = _reference(fp, pdi, params)
    assert out.shape == (batch, 11)
    assert jnp.allclose(out, ref, **TOL)

    # Larger, non-tile-aligned batch (exercises the >=2-step grid + padding path).
    batch2 = 600
    fp2 = jax.random.normal(k_fp2, (batch2, n_fp), jnp.float32)
    pdi2 = jax.random.normal(k_pdi2, (batch2, 1), jnp.float32)
    out2 = mlp_forward(fp2, pdi2, kparams, n_out)
    jax.block_until_ready(out2)
    ref2 = _reference(fp2, pdi2, params)
    assert out2.shape == (batch2, 11)
    assert jnp.allclose(out2, ref2, **TOL)

    print("KERNEL_OK")
</pallas_src>

<mosaic_0001>
module attributes {stable_mosaic.version = 11 : i64} {
  func.func @mlp_kernel(%arg0: i32, %arg1: memref<8x32xf32, #tpu.memory_space<vmem>>, %arg2: memref<8x1xf32, #tpu.memory_space<vmem>>, %arg3: memref<32x128xbf16, #tpu.memory_space<vmem>>, %arg4: memref<1x128xf32, #tpu.memory_space<vmem>>, %arg5: memref<1x128xf32, #tpu.memory_space<vmem>>, %arg6: memref<128x128xbf16, #tpu.memory_space<vmem>>, %arg7: memref<1x128xf32, #tpu.memory_space<vmem>>, %arg8: memref<128x128xbf16, #tpu.memory_space<vmem>>, %arg9: memref<1x128xf32, #tpu.memory_space<vmem>>, %arg10: memref<8x128xbf16, #tpu.memory_space<vmem>>) attributes {dimension_semantics = [#tpu.dimension_semantics<parallel>], iteration_bounds = array<i64: 1>, scalar_prefetch = 0 : i64, scratch_operands = 0 : i64, tpu.core_type = #tpu.core_type<tc>, window_params = [{transform_indices = @transform_0, window_bounds = array<i64: 8, 32>}, {transform_indices = @transform_1, window_bounds = array<i64: 8, 1>}, {pipeline_mode = #tpu.pipeline_mode<synchronous>, transform_indices = @transform_2, window_bounds = array<i64: 32, 128>}, {pipeline_mode = #tpu.pipeline_mode<synchronous>, transform_indices = @transform_3, window_bounds = array<i64: 1, 128>}, {pipeline_mode = #tpu.pipeline_mode<synchronous>, transform_indices = @transform_4, window_bounds = array<i64: 1, 128>}, {pipeline_mode = #tpu.pipeline_mode<synchronous>, transform_indices = @transform_5, window_bounds = array<i64: 128, 128>}, {pipeline_mode = #tpu.pipeline_mode<synchronous>, transform_indices = @transform_6, window_bounds = array<i64: 1, 128>}, {pipeline_mode = #tpu.pipeline_mode<synchronous>, transform_indices = @transform_7, window_bounds = array<i64: 128, 128>}, {pipeline_mode = #tpu.pipeline_mode<synchronous>, transform_indices = @transform_8, window_bounds = array<i64: 1, 128>}, {transform_indices = @transform_9, window_bounds = array<i64: 8, 128>}]} {
    %c0 = arith.constant 0 : index
    %c0_0 = arith.constant 0 : index
    %0 = vector.load %arg1[%c0, %c0_0] : memref<8x32xf32, #tpu.memory_space<vmem>>, vector<8x32xf32>
    %c0_1 = arith.constant 0 : index
    %c0_2 = arith.constant 0 : index
    %1 = vector.load %arg2[%c0_1, %c0_2] : memref<8x1xf32, #tpu.memory_space<vmem>>, vector<8x1xf32>
    %2 = arith.truncf %0 : vector<8x32xf32> to vector<8x32xbf16>
    %c0_3 = arith.constant 0 : index
    %c0_4 = arith.constant 0 : index
    %3 = vector.load %arg3[%c0_3, %c0_4] : memref<32x128xbf16, #tpu.memory_space<vmem>>, vector<32x128xbf16>
    %cst = arith.constant dense<0.000000e+00> : vector<8x128xf32>
    %4 = tpu.matmul %2, %3, %cst {dimension_numbers = #tpu.dot_dimension_numbers<[1], [0], [0], [1], [0, 0, 1, 1], [], []>} : vector<8x32xbf16>, vector<32x128xbf16>, vector<8x128xf32> -> vector<8x128xf32>
    %c0_5 = arith.constant 0 : index
    %c0_6 = arith.constant 0 : index
    %5 = vector.load %arg4[%c0_5, %c0_6] : memref<1x128xf32, #tpu.memory_space<vmem>>, vector<1x128xf32>
    %6 = vector.broadcast %1 : vector<8x1xf32> to vector<8x128xf32>
    %7 = vector.broadcast %5 : vector<1x128xf32> to vector<8x128xf32>
    %8 = arith.mulf %6, %7 : vector<8x128xf32>
    %9 = arith.addf %4, %8 : vector<8x128xf32>
    %c0_7 = arith.constant 0 : index
    %c0_8 = arith.constant 0 : index
    %10 = vector.load %arg5[%c0_7, %c0_8] : memref<1x128xf32, #tpu.memory_space<vmem>>, vector<1x128xf32>
    %11 = vector.broadcast %10 : vector<1x128xf32> to vector<8x128xf32>
    %12 = arith.addf %9, %11 : vector<8x128xf32>
    %cst_9 = arith.constant 0.000000e+00 : f32
    %13 = vector.broadcast %cst_9 : f32 to vector<8x128xf32>
    %14 = arith.maximumf %12, %13 : vector<8x128xf32>
    %15 = arith.truncf %14 : vector<8x128xf32> to vector<8x128xbf16>
    %c0_10 = arith.constant 0 : index
    %c0_11 = arith.constant 0 : index
    %16 = vector.load %arg6[%c0_10, %c0_11] : memref<128x128xbf16, #tpu.memory_space<vmem>>, vector<128x128xbf16>
    %cst_12 = arith.constant dense<0.000000e+00> : vector<8x128xf32>
    %17 = tpu.matmul %15, %16, %cst_12 {dimension_numbers = #tpu.dot_dimension_numbers<[1], [0], [0], [1], [0, 0, 1, 1], [], []>} : vector<8x128xbf16>, vector<128x128xbf16>, vector<8x128xf32> -> vector<8x128xf32>
    %c0_13 = arith.constant 0 : index
    %c0_14 = arith.constant 0 : index
    %18 = vector.load %arg7[%c0_13, %c0_14] : memref<1x128xf32, #tpu.memory_space<vmem>>, vector<1x128xf32>
    %19 = vector.broadcast %18 : vector<1x128xf32> to vector<8x128xf32>
    %20 = arith.addf %17, %19 : vector<8x128xf32>
    %cst_15 = arith.constant 0.000000e+00 : f32
    %21 = vector.broadcast %cst_15 : f32 to vector<8x128xf32>
    %22 = arith.maximumf %20, %21 : vector<8x128xf32>
    %23 = arith.truncf %22 : vector<8x128xf32> to vector<8x128xbf16>
    %c0_16 = arith.constant 0 : index
    %c0_17 = arith.constant 0 : index
    %24 = vector.load %arg8[%c0_16, %c0_17] : memref<128x128xbf16, #tpu.memory_space<vmem>>, vector<128x128xbf16>
    %cst_18 = arith.constant dense<0.000000e+00> : vector<8x128xf32>
    %25 = tpu.matmul %23, %24, %cst_18 {dimension_numbers = #tpu.dot_dimension_numbers<[1], [0], [0], [1], [0, 0, 1, 1], [], []>} : vector<8x128xbf16>, vector<128x128xbf16>, vector<8x128xf32> -> vector<8x128xf32>
    %c0_19 = arith.constant 0 : index
    %c0_20 = arith.constant 0 : index
    %26 = vector.load %arg9[%c0_19, %c0_20] : memref<1x128xf32, #tpu.memory_space<vmem>>, vector<1x128xf32>
    %27 = vector.broadcast %26 : vector<1x128xf32> to vector<8x128xf32>
    %28 = arith.addf %25, %27 : vector<8x128xf32>
    %29 = arith.truncf %28 : vector<8x128xf32> to vector<8x128xbf16>
    %c0_21 = arith.constant 0 : index
    %c0_22 = arith.constant 0 : index
    %30 = vector.load %arg10[%c0_21, %c0_22] : memref<8x128xbf16, #tpu.memory_space<vmem>>, vector<8x128xbf16>
    tpu.vector_store %arg10[%c0_21, %c0_22], %29 {strides = array<i32>} : memref<8x128xbf16, #tpu.memory_space<vmem>>, vector<8x128xbf16>,
    return
  }
  func.func @transform_0(%arg0: i32) -> (i32, i32) {
    %c0_i32 = arith.constant 0 : i32
    %c0_i32_0 = arith.constant 0 : i32
    return %arg0, %c0_i32 : i32, i32
  }
  func.func @transform_1(%arg0: i32) -> (i32, i32) {
    %c0_i32 = arith.constant 0 : i32
    %c0_i32_0 = arith.constant 0 : i32
    return %arg0, %c0_i32 : i32, i32
  }
  func.func @transform_2(%arg0: i32) -> (i32, i32) {
    %c0_i32 = arith.constant 0 : i32
    %c0_i32_0 = arith.constant 0 : i32
    %c0_i32_1 = arith.constant 0 : i32
    return %c0_i32, %c0_i32_0 : i32, i32
  }
  func.func @transform_3(%arg0: i32) -> (i32, i32) {
    %c0_i32 = arith.constant 0 : i32
    %c0_i32_0 = arith.constant 0 : i32
    %c0_i32_1 = arith.constant 0 : i32
    return %c0_i32, %c0_i32_0 : i32, i32
  }
  func.func @transform_4(%arg0: i32) -> (i32, i32) {
    %c0_i32 = arith.constant 0 : i32
    %c0_i32_0 = arith.constant 0 : i32
    %c0_i32_1 = arith.constant 0 : i32
    return %c0_i32, %c0_i32_0 : i32, i32
  }
  func.func @transform_5(%arg0: i32) -> (i32, i32) {
    %c0_i32 = arith.constant 0 : i32
    %c0_i32_0 = arith.constant 0 : i32
    %c0_i32_1 = arith.constant 0 : i32
    return %c0_i32, %c0_i32_0 : i32, i32
  }
  func.func @transform_6(%arg0: i32) -> (i32, i32) {
    %c0_i32 = arith.constant 0 : i32
    %c0_i32_0 = arith.constant 0 : i32
    %c0_i32_1 = arith.constant 0 : i32
    return %c0_i32, %c0_i32_0 : i32, i32
  }
  func.func @transform_7(%arg0: i32) -> (i32, i32) {
    %c0_i32 = arith.constant 0 : i32
    %c0_i32_0 = arith.constant 0 : i32
    %c0_i32_1 = arith.constant 0 : i32
    return %c0_i32, %c0_i32_0 : i32, i32
  }
  func.func @transform_8(%arg0: i32) -> (i32, i32) {
    %c0_i32 = arith.constant 0 : i32
    %c0_i32_0 = arith.constant 0 : i32
    %c0_i32_1 = arith.constant 0 : i32
    return %c0_i32, %c0_i32_0 : i32, i32
  }
  func.func @transform_9(%arg0: i32) -> (i32, i32) {
    %c0_i32 = arith.constant 0 : i32
    %c0_i32_0 = arith.constant 0 : i32
    return %arg0, %c0_i32 : i32, i32
  }
}

</mosaic_0001>

<llo_original>
// kernel: tpu_custom_call.1
$region0: #{tpu_custom_call.1}
  #allocation0 [shape = 'u32[]', space=smem, size = 0x4, offset = 0x4, fixed_abs, tag = 'smem constant byte address 0x4 - core index']
  #allocation1 [shape = 'u32[72,128]{1,0:T(1,128)}', space=vmem, size = 0x9000, scoped, tag = 'internal scratch']
  %s0 = inlined_call_operand.vmem [shape: f32[8,32], index: 0, kind: input, shape index: {}]
  %s1 = inlined_call_operand.vmem [shape: f32[8,1], index: 1, kind: input, shape index: {}]
  %s2 = inlined_call_operand.hbm [shape: bf16[32,128], index: 2, kind: input, shape index: {}]
  %s3 = inlined_call_operand.vmem [shape: f32[1,128], index: 3, kind: input, shape index: {}]
  %s4 = inlined_call_operand.vmem [shape: f32[1,128], index: 4, kind: input, shape index: {}]
  %s5 = inlined_call_operand.hbm [shape: bf16[128,128], index: 5, kind: input, shape index: {}]
  %s6 = inlined_call_operand.vmem [shape: f32[1,128], index: 6, kind: input, shape index: {}]
  %s7 = inlined_call_operand.hbm [shape: bf16[128,128], index: 7, kind: input, shape index: {}]
  %s8 = inlined_call_operand.vmem [shape: f32[1,128], index: 8, kind: input, shape index: {}]
  %s9 = inlined_call_operand.hbm [shape: bf16[8,128], index: 9, kind: output, shape index: {}]
  %s10 = sld [smem:[#allocation0]]
  $region58: #{tpu_custom_call.1} parent=0
    _
  %s12 = ssub.s32 1, %s10
  %s13 = scalar_select 0, %s12, %s10
  $region1: #{tpu_custom_call.1} parent=0
    #allocation2 [shape = 'u8[8192]{0}', space=vmem, size = 0x2000, scoped, tag = 'input window, operand 2, single buffered']
    #allocation3 [shape = 's32[1]{0}', space=sflag, size = 0x4, scoped, tag = 'scoped memory for tpu_custom_call.1']
    #allocation4 [shape = 's32[1]{0}', space=sflag, size = 0x4, scoped, tag = 'scoped memory for tpu_custom_call.1']
    #allocation5 [shape = 'u8[32768]{0}', space=vmem, size = 0x8000, scoped, tag = 'input window, operand 5, single buffered']
    #allocation6 [shape = 's32[1]{0}', space=sflag, size = 0x4, scoped, tag = 'scoped memory for tpu_custom_call.1']
    #allocation7 [shape = 'u8[32768]{0}', space=vmem, size = 0x8000, scoped, tag = 'input window, operand 7, single buffered']
    #allocation8 [shape = 'u8[2048]{0}', space=vmem, size = 0x800, scoped, tag = 'output window, operand 0, single buffered']
    %14 = vsyncpa [#allocation3], 0
    %15 = vsyncpa [#allocation6], 0
    %16 = vsyncpa [#allocation4], 0
    // Predicated region
    $region2: #{tpu_custom_call.1} parent=1 // pred_check
      _
    $region3: #{tpu_custom_call.1} parent=1 // pred_check_branch
      %18 = sbr.rel (0) target = $region5
    $region4: #{tpu_custom_call.1} parent=1 // pred_region
      _
    $region5: #{tpu_custom_call.1} parent=1 // pred_fallthru
      _
    // Predicated region
    $region6: #{tpu_custom_call.1} parent=1 // pred_check
      _
    $region7: #{tpu_custom_call.1} parent=1 // pred_check_branch
      %20 = sbr.rel (0) target = $region9
    $region8: #{tpu_custom_call.1} parent=1 // pred_region
      _
    $region9: #{tpu_custom_call.1} parent=1 // pred_fallthru
      _
    // Predicated region
    $region10: #{tpu_custom_call.1} parent=1 // pred_check
      _
    $region11: #{tpu_custom_call.1} parent=1 // pred_check_branch
      %22 = sbr.rel (0) target = $region13
    $region12: #{tpu_custom_call.1} parent=1 // pred_region
      %24 = vsyncadd [#allocation3], 0
      %s25 = sshll.u32 %s2, 4
      %s26 = int_to_ptr.hbm [resolvable:$true] %s25
      %s27 = sshll.u32 [#allocation2], 4
      %s28 = int_to_ptr.vmem [resolvable:$true] %s27
      %33 = dma.hbm_to_vmem [thread:$0]  %s26, 256, %s28, [#allocation3], 64, 64, 4
    $region13: #{tpu_custom_call.1} parent=1 // pred_fallthru
      _
    // Predicated region
    $region14: #{tpu_custom_call.1} parent=1 // pred_check
      _
    $region15: #{tpu_custom_call.1} parent=1 // pred_check_branch
      %35 = sbr.rel (0) target = $region17
    $region16: #{tpu_custom_call.1} parent=1 // pred_region
      _
    $region17: #{tpu_custom_call.1} parent=1 // pred_fallthru
      _
    // Predicated region
    $region18: #{tpu_custom_call.1} parent=1 // pred_check
      _
    $region19: #{tpu_custom_call.1} parent=1 // pred_check_branch
      %37 = sbr.rel (0) target = $region21
    $region20: #{tpu_custom_call.1} parent=1 // pred_region
      _
    $region21: #{tpu_custom_call.1} parent=1 // pred_fallthru
      _
    // Predicated region
    $region22: #{tpu_custom_call.1} parent=1 // pred_check
      _
    $region23: #{tpu_custom_call.1} parent=1 // pred_check_branch
      %39 = sbr.rel (0) target = $region25
    $region24: #{tpu_custom_call.1} parent=1 // pred_region
      %41 = vsyncadd [#allocation6], 0
      %s42 = sshll.u32 %s5, 4
      %s43 = int_to_ptr.hbm [resolvable:$true] %s42
      %s44 = sshll.u32 [#allocation5], 4
      %s45 = int_to_ptr.vmem [resolvable:$true] %s44
      %50 = dma.hbm_to_vmem [thread:$0]  %s43, 1024, %s45, [#allocation6], 64, 64, 4
    $region25: #{tpu_custom_call.1} parent=1 // pred_fallthru
      _
    // Predicated region
    $region26: #{tpu_custom_call.1} parent=1 // pred_check
      _
    $region27: #{tpu_custom_call.1} parent=1 // pred_check_branch
      %52 = sbr.rel (0) target = $region29
    $region28: #{tpu_custom_call.1} parent=1 // pred_region
      _
    $region29: #{tpu_custom_call.1} parent=1 // pred_fallthru
      _
    // Predicated region
    $region30: #{tpu_custom_call.1} parent=1 // pred_check
      _
    $region31: #{tpu_custom_call.1} parent=1 // pred_check_branch
      %54 = sbr.rel (0) target = $region33
    $region32: #{tpu_custom_call.1} parent=1 // pred_region
      %56 = vsyncadd [#allocation6], 0
      %s57 = sshll.u32 %s7, 4
      %s58 = int_to_ptr.hbm [resolvable:$true] %s57
      %s59 = sshll.u32 [#allocation7], 4
      %s60 = int_to_ptr.vmem [resolvable:$true] %s59
      %65 = dma.hbm_to_vmem [thread:$0]  %s58, 1024, %s60, [#allocation6], 64, 64, 4
    $region33: #{tpu_custom_call.1} parent=1 // pred_fallthru
      _
    // Predicated region
    $region34: #{tpu_custom_call.1} parent=1 // pred_check
      _
    $region35: #{tpu_custom_call.1} parent=1 // pred_check_branch
      %67 = sbr.rel (0) target = $region37
    $region36: #{tpu_custom_call.1} parent=1 // pred_region
      _
    $region37: #{tpu_custom_call.1} parent=1 // pred_fallthru
      _
    // Predicated region
    $region38: #{tpu_custom_call.1} parent=1 // pred_check
      _
    $region39: #{tpu_custom_call.1} parent=1 // pred_check_branch
      %69 = sbr.rel (0) target = $region41
    $region40: #{tpu_custom_call.1} parent=1 // pred_region
      %71 = dma.done [#allocation3], 256
    $region41: #{tpu_custom_call.1} parent=1 // pred_fallthru
      _
    // Predicated region
    $region42: #{tpu_custom_call.1} parent=1 // pred_check
      _
    $region43: #{tpu_custom_call.1} parent=1 // pred_check_branch
      %73 = sbr.rel (0) target = $region45
    $region44: #{tpu_custom_call.1} parent=1 // pred_region
      %75 = dma.done [#allocation6], 1024
    $region45: #{tpu_custom_call.1} parent=1 // pred_fallthru
      _
    // Predicated region
    $region46: #{tpu_custom_call.1} parent=1 // pred_check
      _
    $region47: #{tpu_custom_call.1} parent=1 // pred_check_branch
      %77 = sbr.rel (0) target = $region49
    $region48: #{tpu_custom_call.1} parent=1 // pred_region
      %79 = dma.done [#allocation6], 1024
    $region49: #{tpu_custom_call.1} parent=1 // pred_fallthru
      _
    %v81 = vld [vmem:[%s0] sm:$0xff]
    %v82 = vld [vmem:[%s1] sm:$0xff]
    %v83 = vpack.c.bf16 %v81, %v81
    %v84 = vld [vmem:[#allocation2] sm:$0xf]
    %v85 = vld [vmem:[#allocation2 + $0x4] sm:$0xf]
    %v86 = vld [vmem:[#allocation2 + $0x8] sm:$0xf]
    %v87 = vld [vmem:[#allocation2 + $0xc] sm:$0xf]
    %v88 = vld [vmem:[%s3] sm:$0x1]
    %90 = vset.pattern.permute.xlu0 0
    %91 = vperm.xlu0 %90, %v82
    %v92 = vpop.permute.xlu0 %91
    %v95 = vperm.slane %v88, 0
    %v97 = vmul.f32 %v92, %v95
    %v102 = vunpack.c.l.b16 %v84
    %v103 = vunpack.c.l.b16 %v85
    %v104 = vunpack.c.l.b16 %v86
    %v105 = vunpack.c.l.b16 %v87
    %v106 = vpack.c.b16 %v103, %v102
    %v107 = vpack.c.b16 %v105, %v104
    %vm110 = vcmask 261120
    %v112 = vsel %vm110, %v83, 0
    %114 = vmatpush.bf16.msra.mxu0 0
    %115 = vmatpush.bf16.msra.mxu0 0
    %116 = vmatpush.bf16.msra.mxu0 0
    %117 = vmatpush.bf16.msra.mxu0 0
    %118 = vmatpush.bf16.msra.mxu0 0
    %119 = vmatpush.bf16.msra.mxu0 0
    %120 = vmatpush.bf16.msra.mxu0 %v107
    %121 = vmatpush.bf16.msra.mxu0 %v106
    %122 = vmatmul.bf16.gmra.mxu0 %v112
    %v123 = vpop.f32.mrf.mxu0
    %v124 = vadd.f32 %v97, %v123
    %v125 = vpop.f32.mrf.mxu0
    %126 = vdwg.mxu0
    %v127 = vld [vmem:[%s4] sm:$0x1]
    %v129 = vperm.slane %v127, 0
    %v131 = vadd.f32 %v124, %v129
    %v132 = vmax.f32 %v131, 0.0
    %v133 = vpack.c.bf16 %v132, %v132
    %v134 = vld [vmem:[#allocation5] sm:$0xf]
    %v135 = vld [vmem:[#allocation5 + $0x4] sm:$0xf]
    %v136 = vld [vmem:[#allocation5 + $0x8] sm:$0xf]
    %v137 = vld [vmem:[#allocation5 + $0xc] sm:$0xf]
    %v138 = vld [vmem:[#allocation5 + $0x10] sm:$0xf]
    %v139 = vld [vmem:[#allocation5 + $0x14] sm:$0xf]
    %v140 = vld [vmem:[#allocation5 + $0x18] sm:$0xf]
    %v141 = vld [vmem:[#allocation5 + $0x1c] sm:$0xf]
    %v142 = vld [vmem:[#allocation5 + $0x20] sm:$0xf]
    %v143 = vld [vmem:[#allocation5 + $0x24] sm:$0xf]
    %v144 = vld [vmem:[#allocation5 + $0x28] sm:$0xf]
    %v145 = vld [vmem:[#allocation5 + $0x2c] sm:$0xf]
    %v146 = vld [vmem:[#allocation5 + $0x30] sm:$0xf]
    %v147 = vld [vmem:[#allocation5 + $0x34] sm:$0xf]
    %v148 = vld [vmem:[#allocation5 + $0x38] sm:$0xf]
    %v149 = vld [vmem:[#allocation5 + $0x3c] sm:$0xf]
    %v150 = vld [vmem:[%s6] sm:$0x1]
    %v152 = vperm.slane %v150, 0
    %v170 = vunpack.c.l.b16 %v134
    %v171 = vunpack.c.l.b16 %v135
    %v172 = vunpack.c.l.b16 %v136
    %v173 = vunpack.c.l.b16 %v137
    %v174 = vunpack.c.l.b16 %v138
    %v175 = vunpack.c.l.b16 %v139
    %v176 = vunpack.c.l.b16 %v140
    %v177 = vunpack.c.l.b16 %v141
    %v178 = vunpack.c.l.b16 %v142
    %v179 = vunpack.c.l.b16 %v143
    %v180 = vunpack.c.l.b16 %v144
    %v181 = vunpack.c.l.b16 %v145
    %v182 = vunpack.c.l.b16 %v146
    %v183 = vunpack.c.l.b16 %v147
    %v184 = vunpack.c.l.b16 %v148
    %v185 = vunpack.c.l.b16 %v149
    %v186 = vpack.c.b16 %v171, %v170
    %v187 = vpack.c.b16 %v173, %v172
    %v188 = vpack.c.b16 %v175, %v174
    %v189 = vpack.c.b16 %v177, %v176
    %v190 = vpack.c.b16 %v179, %v178
    %v191 = vpack.c.b16 %v181, %v180
    %v192 = vpack.c.b16 %v183, %v182
    %v193 = vpack.c.b16 %v185, %v184
    %202 = vmatpush.bf16.msra.mxu0 %v193
    %203 = vmatpush.bf16.msra.mxu0 %v192
    %204 = vmatpush.bf16.msra.mxu0 %v191
    %205 = vmatpush.bf16.msra.mxu0 %v190
    %206 = vmatpush.bf16.msra.mxu0 %v189
    %207 = vmatpush.bf16.msra.mxu0 %v188
    %208 = vmatpush.bf16.msra.mxu0 %v187
    %209 = vmatpush.bf16.msra.mxu0 %v186
    %210 = vmatmul.bf16.gmra.mxu0 %v133
    %v211 = vpop.f32.mrf.mxu0
    %v212 = vadd.f32 %v152, %v211
    %v213 = vpop.f32.mrf.mxu0
    %214 = vdwg.mxu0
    %v215 = vmax.f32 %v212, 0.0
    %v216 = vpack.c.bf16 %v215, %v215
    %v217 = vld [vmem:[#allocation7] sm:$0xf]
    %v218 = vld [vmem:[#allocation7 + $0x4] sm:$0xf]
    %v219 = vld [vmem:[#allocation7 + $0x8] sm:$0xf]
    %v220 = vld [vmem:[#allocation7 + $0xc] sm:$0xf]
    %v221 = vld [vmem:[#allocation7 + $0x10] sm:$0xf]
    %v222 = vld [vmem:[#allocation7 + $0x14] sm:$0xf]
    %v223 = vld [vmem:[#allocation7 + $0x18] sm:$0xf]
    %v224 = vld [vmem:[#allocation7 + $0x1c] sm:$0xf]
    %v225 = vld [vmem:[#allocation7 + $0x20] sm:$0xf]
    %v226 = vld [vmem:[#allocation7 + $0x24] sm:$0xf]
    %v227 = vld [vmem:[#allocation7 + $0x28] sm:$0xf]
    %v228 = vld [vmem:[#allocation7 + $0x2c] sm:$0xf]
    %v229 = vld [vmem:[#allocation7 + $0x30] sm:$0xf]
    %v230 = vld [vmem:[#allocation7 + $0x34] sm:$0xf]
    %v231 = vld [vmem:[#allocation7 + $0x38] sm:$0xf]
    %v232 = vld [vmem:[#allocation7 + $0x3c] sm:$0xf]
    %v233 = vld [vmem:[%s8] sm:$0x1]
    %v235 = vperm.slane %v233, 0
    %v253 = vunpack.c.l.b16 %v217
    %v254 = vunpack.c.l.b16 %v218
    %v255 = vunpack.c.l.b16 %v219
    %v256 = vunpack.c.l.b16 %v220
    %v257 = vunpack.c.l.b16 %v221
    %v258 = vunpack.c.l.b16 %v222
    %v259 = vunpack.c.l.b16 %v223
    %v260 = vunpack.c.l.b16 %v224
    %v261 = vunpack.c.l.b16 %v225
    %v262 = vunpack.c.l.b16 %v226
    %v263 = vunpack.c.l.b16 %v227
    %v264 = vunpack.c.l.b16 %v228
    %v265 = vunpack.c.l.b16 %v229
    %v266 = vunpack.c.l.b16 %v230
    %v267 = vunpack.c.l.b16 %v231
    %v268 = vunpack.c.l.b16 %v232
    %v269 = vpack.c.b16 %v254, %v253
    %v270 = vpack.c.b16 %v256, %v255
    %v271 = vpack.c.b16 %v258, %v257
    %v272 = vpack.c.b16 %v260, %v259
    %v273 = vpack.c.b16 %v262, %v261
    %v274 = vpack.c.b16 %v264, %v263
    %v275 = vpack.c.b16 %v266, %v265
    %v276 = vpack.c.b16 %v268, %v267
    %285 = vmatpush.bf16.msra.mxu0 %v276
    %286 = vmatpush.bf16.msra.mxu0 %v275
    %287 = vmatpush.bf16.msra.mxu0 %v274
    %288 = vmatpush.bf16.msra.mxu0 %v273
    %289 = vmatpush.bf16.msra.mxu0 %v272
    %290 = vmatpush.bf16.msra.mxu0 %v271
    %291 = vmatpush.bf16.msra.mxu0 %v270
    %292 = vmatpush.bf16.msra.mxu0 %v269
    %293 = vmatmul.bf16.gmra.mxu0 %v216
    %v294 = vpop.f32.mrf.mxu0
    %v295 = vadd.f32 %v235, %v294
    %v296 = vpop.f32.mrf.mxu0
    %297 = vdwg.mxu0
    %v298 = vpack.c.bf16 %v295, %v295
    %299 = vst [vmem:[#allocation8] sm:$0xf] %v298
    // Predicated region
    $region50: #{tpu_custom_call.1} parent=1 // pred_check
      _
    $region51: #{tpu_custom_call.1} parent=1 // pred_check_branch
      %301 = sbr.rel (0) target = $region53
    $region52: #{tpu_custom_call.1} parent=1 // pred_region
      %303 = vsyncadd [#allocation4], 0
      %s305 = sshll.u32 [#allocation8], 4
      %s306 = int_to_ptr.vmem [resolvable:$true] %s305
      %s307 = sshll.u32 %s9, 4
      %s308 = int_to_ptr.hbm [resolvable:$true] %s307
      %310 = dma.vmem_to_hbm [thread:$0]  %s306, 64, %s308, [#allocation4]
    $region53: #{tpu_custom_call.1} parent=1 // pred_fallthru
      _
    // Predicated region
    $region54: #{tpu_custom_call.1} parent=1 // pred_check
      _
    $region55: #{tpu_custom_call.1} parent=1 // pred_check_branch
      %312 = sbr.rel (0) target = $region57
    $region56: #{tpu_custom_call.1} parent=1 // pred_region
      %314 = dma.done [#allocation4], 64
    $region57: #{tpu_custom_call.1} parent=1 // pred_fallthru
      _
    %315 = vsyncpa [#allocation3], 1
    %316 = vsyncpa [#allocation6], 1
    %317 = vsyncpa [#allocation4], 1

</llo_original>
